<compile_context>
chip_gen: v6e
topology: v6e:2x2x1
jax: 0.10.0
libtpu: 0.0.40
codegen_flags: <defaults>
</compile_context>

<pallas_src>
import math
import jax
import jax.numpy as jnp
from jax.experimental import pallas as pl
from jax.experimental.pallas import tpu as pltpu

_LANE = 128                      # vreg lane width
_TARGET_BLOCK_BYTES = 2 << 20    # ~2 MiB per x block


def _add_pe_kernel(x_ref, pe_ref, o_ref):
    # x_ref: (bb, T, L) block; pe_ref: (1, T, L) block, broadcast over batch dim.
    o_ref[...] = x_ref[...] + pe_ref[...]


def _sublane(dtype) -> int:
    # Native (sublane, 128) tile: 8 for 4-byte, 16 for 2-byte, 32 for 1-byte dtypes.
    return max(8, 32 // jnp.dtype(dtype).itemsize)


def _vmem_limit_bytes(x_block_bytes: int, pe_block_bytes: int) -> int:
    # Double-buffered x-in + out + pe-in, plus headroom.  Cap at 48 MiB to stay
    # inside v7x's 64 MiB physical VMEM; floor at 16 MiB.
    need = 2 * (2 * x_block_bytes + pe_block_bytes) + (4 << 20)
    return int(min(48 << 20, max(16 << 20, need)))


def make_positional_encoding(max_len: int, emb_dim: int, dtype=jnp.float32):
    """Build pe buffer (1, max_len, emb_dim) exactly as the PyTorch __init__.

    Build it in the serving dtype up front so the forward pass never needs a
    per-call cast over pe.
    """
    assert emb_dim % 2 == 0, "emb_dim must be even"  # same limitation as the PyTorch recipe
    position = jnp.arange(0, max_len, dtype=jnp.float32)[:, None]           # (max_len, 1)
    div_term = jnp.exp(
        jnp.arange(0, emb_dim, 2, dtype=jnp.float32)
        * -(math.log(10000.0) / emb_dim)
    )                                                                        # (emb_dim//2,)
    angles = position * div_term                                             # (max_len, emb_dim//2)
    pe = jnp.zeros((max_len, emb_dim), dtype=jnp.float32)
    pe = pe.at[:, 0::2].set(jnp.sin(angles))
    pe = pe.at[:, 1::2].set(jnp.cos(angles))
    return pe[None, :, :].astype(dtype)                                      # (1, max_len, emb_dim)


def _positional_encoding_forward(x, pe, *, donate_x: bool = False):
    """x: (B, S, D), pe: (1, max_len, D); returns x + pe[:, :S].

    Set donate_x=True only if the caller actually donates x at the jit
    boundary (jax.jit(..., donate_argnums=...)); otherwise the alias forces a
    defensive copy of x and makes the op slower.
    """
    B, S, D = x.shape
    max_len = pe.shape[1]
    if S > max_len:
        raise ValueError(f"sequence length {S} exceeds max_len {max_len}")
    if pe.dtype != x.dtype:
        # Prefer building pe in the serving dtype (make_positional_encoding(dtype=...));
        # this cast only runs for mismatched callers and fuses under jit.
        pe = pe.astype(x.dtype)

    itemsize = jnp.dtype(x.dtype).itemsize
    sub = _sublane(x.dtype)
    io_aliases = {0: 0} if donate_x else {}

    if (S * D) % _LANE == 0 and (max_len * D) % _LANE == 0:
        # ---------------- lane-dense path: trailing (S, D) viewed as 128-lane rows --------------
        rows = (S * D) // _LANE
        max_rows = (max_len * D) // _LANE
        x_f = x.reshape(B, rows, _LANE)
        pe_f = pe.reshape(1, max_rows, _LANE)   # contiguous, so prefix rows == pe[:, :S]

        # dtype-aware tile: ~2 MiB x block.
        target_rows = max(sub, _TARGET_BLOCK_BYTES // (_LANE * itemsize))
        if rows <= target_rows:
            tr = rows
            bb = max(1, min(B, target_rows // rows))       # batch blocking for small S*D
        else:
            tr = max(sub, (target_rows // sub) * sub)      # sublane-aligned row tile
            bb = 1

        # BlockSpec divisibility: a block of `rows` rows that is not sublane-aligned is only
        # legal if it equals the array's full dim, so slice pe to its valid prefix in that case.
        if tr == rows and rows % sub != 0 and rows != max_rows:
            pe_f = pe_f[:, :rows, :]

        grid = (pl.cdiv(rows, tr), pl.cdiv(B, bb))  # batch innermost -> pe tile stays resident
        x_blk_bytes = bb * tr * _LANE * itemsize
        pe_blk_bytes = tr * _LANE * itemsize

        out = pl.pallas_call(
            _add_pe_kernel,
            out_shape=jax.ShapeDtypeStruct((B, rows, _LANE), x.dtype),
            grid_spec=pltpu.PrefetchScalarGridSpec(
                num_scalar_prefetch=0,
                grid=grid,
                in_specs=[
                    pl.BlockSpec((bb, tr, _LANE), lambda r, b: (b, r, 0)),
                    pl.BlockSpec((1, tr, _LANE), lambda r, b: (0, r, 0)),
                ],
                out_specs=pl.BlockSpec((bb, tr, _LANE), lambda r, b: (b, r, 0)),
            ),
            compiler_params=pltpu.CompilerParams(
                dimension_semantics=("parallel", "parallel"),
                vmem_limit_bytes=_vmem_limit_bytes(x_blk_bytes, pe_blk_bytes),
            ),
            input_output_aliases=io_aliases,
        )(x_f, pe_f)
        return out.reshape(B, S, D)

    # ---------------- fallback: S*D not 128-alignable; tile the sequence axis directly ----------
    # TODO(synk): D < 128 here means masked partial stores; padding S*D up to a multiple of 128
    # (extra copy) could recover full-width stores if this path ever becomes hot.
    target_seq = max(sub, _TARGET_BLOCK_BYTES // max(1, D * itemsize))
    if S <= target_seq:
        ts = S
        bb = max(1, min(B, target_seq // max(1, S)))
    else:
        ts = max(sub, (target_seq // sub) * sub)
        bb = 1

    pe_in = pe
    if ts == S and S % sub != 0 and S != max_len:
        pe_in = pe[:, :S, :]

    grid = (pl.cdiv(S, ts), pl.cdiv(B, bb))
    x_blk_bytes = bb * ts * D * itemsize
    pe_blk_bytes = ts * D * itemsize

    return pl.pallas_call(
        _add_pe_kernel,
        out_shape=jax.ShapeDtypeStruct((B, S, D), x.dtype),
        grid_spec=pltpu.PrefetchScalarGridSpec(
            num_scalar_prefetch=0,
            grid=grid,
            in_specs=[
                pl.BlockSpec((bb, ts, D), lambda s, b: (b, s, 0)),
                pl.BlockSpec((1, ts, D), lambda s, b: (0, s, 0)),
            ],
            out_specs=pl.BlockSpec((bb, ts, D), lambda s, b: (b, s, 0)),
        ),
        compiler_params=pltpu.CompilerParams(
            dimension_semantics=("parallel", "parallel"),
            vmem_limit_bytes=_vmem_limit_bytes(x_blk_bytes, pe_blk_bytes),
        ),
        input_output_aliases=io_aliases,
    )(x, pe_in)


# Jitted entry point: reshapes / slices / casts fuse, and dispatch overhead
# around the memory-bound kernel disappears.
positional_encoding_forward = jax.jit(
    _positional_encoding_forward, static_argnames=("donate_x",)
)


if __name__ == "__main__":
    # config: max_len=16, emb_dim=32 ; input batch=2, seq=8
    max_len, emb_dim = 16, 32
    B, S = 2, 8

    key = jax.random.PRNGKey(0)
    x = jax.random.normal(key, (B, S, emb_dim), dtype=jnp.float32)

    pe = make_positional_encoding(max_len, emb_dim, dtype=jnp.float32)

    out = positional_encoding_forward(x, pe)
    out = jax.block_until_ready(out)

    # correctness check vs plain-JAX reference
    ref = x + pe[:, :S]
    assert out.shape == (B, S, emb_dim)
    assert jnp.allclose(out, ref, atol=1e-6), "mismatch vs reference"

    print("KERNEL_OK")
</pallas_src>

<mosaic_0001>
module attributes {stable_mosaic.version = 11 : i64} {
  func.func @_add_pe_kernel(%arg0: i32, %arg1: i32, %arg2: memref<2x2x128xf32, #tpu.memory_space<vmem>>, %arg3: memref<1x2x128xf32, #tpu.memory_space<vmem>>, %arg4: memref<2x2x128xf32, #tpu.memory_space<vmem>>) attributes {dimension_semantics = [#tpu.dimension_semantics<parallel>, #tpu.dimension_semantics<parallel>], iteration_bounds = array<i64: 1, 1>, scalar_prefetch = 0 : i64, scratch_operands = 0 : i64, tpu.core_type = #tpu.core_type<tc>, window_params = [{transform_indices = @transform_0, window_bounds = array<i64: 2, 2, 128>}, {transform_indices = @transform_1, window_bounds = array<i64: 1, 2, 128>}, {transform_indices = @transform_2, window_bounds = array<i64: 2, 2, 128>}]} {
    %c0 = arith.constant 0 : index
    %c0_0 = arith.constant 0 : index
    %c0_1 = arith.constant 0 : index
    %0 = vector.load %arg2[%c0, %c0_0, %c0_1] : memref<2x2x128xf32, #tpu.memory_space<vmem>>, vector<2x2x128xf32>
    %c0_2 = arith.constant 0 : index
    %c0_3 = arith.constant 0 : index
    %c0_4 = arith.constant 0 : index
    %1 = vector.load %arg3[%c0_2, %c0_3, %c0_4] : memref<1x2x128xf32, #tpu.memory_space<vmem>>, vector<1x2x128xf32>
    %2 = vector.broadcast %1 : vector<1x2x128xf32> to vector<2x2x128xf32>
    %3 = arith.addf %0, %2 : vector<2x2x128xf32>
    %c0_5 = arith.constant 0 : index
    %c0_6 = arith.constant 0 : index
    %c0_7 = arith.constant 0 : index
    %4 = vector.load %arg4[%c0_5, %c0_6, %c0_7] : memref<2x2x128xf32, #tpu.memory_space<vmem>>, vector<2x2x128xf32>
    tpu.vector_store %arg4[%c0_5, %c0_6, %c0_7], %3 {strides = array<i32>} : memref<2x2x128xf32, #tpu.memory_space<vmem>>, vector<2x2x128xf32>,
    return
  }
  func.func @transform_0(%arg0: i32, %arg1: i32) -> (i32, i32, i32) {
    %c0_i32 = arith.constant 0 : i32
    %c0_i32_0 = arith.constant 0 : i32
    return %arg1, %arg0, %c0_i32 : i32, i32, i32
  }
  func.func @transform_1(%arg0: i32, %arg1: i32) -> (i32, i32, i32) {
    %c0_i32 = arith.constant 0 : i32
    %c0_i32_0 = arith.constant 0 : i32
    %c0_i32_1 = arith.constant 0 : i32
    return %c0_i32, %arg0, %c0_i32_0 : i32, i32, i32
  }
  func.func @transform_2(%arg0: i32, %arg1: i32) -> (i32, i32, i32) {
    %c0_i32 = arith.constant 0 : i32
    %c0_i32_0 = arith.constant 0 : i32
    return %arg1, %arg0, %c0_i32 : i32, i32, i32
  }
}

</mosaic_0001>

<llo_original>
// kernel: _positional_encoding_forward.1
$region0: #{_positional_encoding_forward.1}
  #allocation0 [shape = 'u32[]', space=smem, size = 0x4, offset = 0x4, fixed_abs, tag = 'smem constant byte address 0x4 - core index']
  #allocation1 [shape = 'u32[144,128]{1,0:T(1,128)}', space=vmem, size = 0x12000, scoped, tag = 'internal scratch']
  %s0 = inlined_call_operand.vmem [shape: f32[2,2,128], index: 0, kind: input, shape index: {}]
  %s1 = inlined_call_operand.vmem [shape: f32[1,2,128], index: 1, kind: input, shape index: {}]
  %s2 = inlined_call_operand.vmem [shape: f32[2,2,128], index: 2, kind: output, shape index: {}]
  %s3 = sld [smem:[#allocation0]]
  $region18: #{_positional_encoding_forward.1} parent=0
    _
  %s5 = ssub.s32 1, %s3
  %s6 = scalar_select 0, %s5, %s3
  // Predicated region
  $region2: #{_positional_encoding_forward.1} parent=0 // pred_check
    _
  $region3: #{_positional_encoding_forward.1} parent=0 // pred_check_branch
    %8 = sbr.rel (0) target = $region5
  $region4: #{_positional_encoding_forward.1} parent=0 // pred_region
    _
  $region5: #{_positional_encoding_forward.1} parent=0 // pred_fallthru
    _
  // Predicated region
  $region6: #{_positional_encoding_forward.1} parent=0 // pred_check
    _
  $region7: #{_positional_encoding_forward.1} parent=0 // pred_check_branch
    %10 = sbr.rel (0) target = $region9
  $region8: #{_positional_encoding_forward.1} parent=0 // pred_region
    _
  $region9: #{_positional_encoding_forward.1} parent=0 // pred_fallthru
    _
  %v11 = vld [vmem:[%s0] sm:$0x3]
  %v12 = vld [vmem:[%s0 + $0x2] sm:$0x3]
  %v13 = vld [vmem:[%s1] sm:$0x3]
  %v14 = vadd.f32 %v11, %v13
  %v15 = vadd.f32 %v12, %v13
  %16 = vst [vmem:[%s2] sm:$0x3] %v14
  %17 = vst [vmem:[%s2 + $0x2] sm:$0x3] %v15
  // Predicated region
  $region10: #{_positional_encoding_forward.1} parent=0 // pred_check
    _
  $region11: #{_positional_encoding_forward.1} parent=0 // pred_check_branch
    %19 = sbr.rel (0) target = $region13
  $region12: #{_positional_encoding_forward.1} parent=0 // pred_region
    _
  $region13: #{_positional_encoding_forward.1} parent=0 // pred_fallthru
    _
  // Predicated region
  $region14: #{_positional_encoding_forward.1} parent=0 // pred_check
    _
  $region15: #{_positional_encoding_forward.1} parent=0 // pred_check_branch
    %21 = sbr.rel (0) target = $region17
  $region16: #{_positional_encoding_forward.1} parent=0 // pred_region
    _
  $region17: #{_positional_encoding_forward.1} parent=0 // pred_fallthru
    _

</llo_original>
